<compile_context>
chip_gen: v6e
topology: v6e:2x2x1
jax: 0.10.0
libtpu: 0.0.40
codegen_flags: <defaults>
</compile_context>

<pallas_src>
import functools

import jax
import jax.numpy as jnp
from jax.experimental import pallas as pl
from jax.experimental.pallas import tpu as pltpu


# --------------------------------------------------------------------------
# Generation-aware VMEM budgets.
# --------------------------------------------------------------------------
def _tpu_vmem_capacity_bytes():
    try:
        return int(pltpu.get_tpu_info().vmem_capacity_bytes)
    except Exception:
        return 64 * 1024 * 1024  # conservative (v7x-sized) fallback


def _budgets():
    vmem = _tpu_vmem_capacity_bytes()
    if vmem >= 96 * 1024 * 1024:
        # v5e / v6e: 128 MiB physical VMEM, single TensorCore.
        return {
            "fused_budget": 80 << 20,
            "fused_limit": 100 << 20,
            "two_pass_limit": 64 << 20,
            "two_cores": False,
        }
    # v7x: 64 MiB physical VMEM, 2 TensorCores.
    return {
        "fused_budget": 36 << 20,
        "fused_limit": 44 << 20,
        "two_pass_limit": 48 << 20,
        "two_cores": True,
    }


def _pick_spatial_tile(C, HW, itemsize, two_pass_limit):
    """Spatial (lane-axis) tile for the two-pass path.

    Target ~4 MiB (C, T) blocks, T a multiple of 128 and >=512 lanes when
    affordable, capped so the scale pass's double-buffered in+out tiles fit
    the VMEM limit. Prefers 128-multiple divisors of HW so the edge tile stays
    full (no masked stores / no iota masking)."""
    per_lane = max(1, C * itemsize)
    hard_cap = max(128 * per_lane, two_pass_limit // 5)
    target = min(4 << 20, hard_cap)
    t = (target // per_lane) // 128 * 128
    t = max(t, 512)
    while t > 128 and t * per_lane > hard_cap:
        t -= 128
    if t >= HW:
        return HW  # single full-width tile (equals the full array dim)
    if HW % 128 == 0:
        # Prefer a divisor of HW, but don't shrink below 512 lanes to get one.
        for cand in range(t // 128, 3, -1):
            T = cand * 128
            if HW % T == 0:
                return T
    return t


# --------------------------------------------------------------------------
# Fused single-pass path: one (Nb, C, HW) block per grid step (2 HBM passes).
# --------------------------------------------------------------------------
def _se_fused(x, w1, b1r, w2, b2r, *, inv_hw, nb, vmem_limit):
    N, C, HW = x.shape
    w_se = w1.shape[1]
    xdtype = x.dtype

    def kernel(x_ref, w1_ref, b1_ref, w2_ref, b2_ref, o_ref):
        xt = x_ref[...]                                               # (nb, C, HW)
        # Squeeze: lane-axis (spatial) sum with f32 accumulation, then * 1/HW.
        s = jnp.sum(xt, axis=-1, dtype=jnp.float32) * inv_hw          # (nb, C)
        # Excitation: one batched (nb, C) @ (C, w_se) matmul pair.
        z1 = jnp.dot(s, w1_ref[...], preferred_element_type=jnp.float32) + b1_ref[...]
        z1 = jnp.maximum(z1, 0.0)                                     # ReLU
        z2 = jnp.dot(z1, w2_ref[...], preferred_element_type=jnp.float32) + b2_ref[...]
        gate = jax.nn.sigmoid(z2).astype(xdtype)                      # (nb, C)
        # Scale: native-dtype multiply; gate broadcast along lanes (spatial).
        o_ref[...] = xt * gate[:, :, None]

    return pl.pallas_call(
        kernel,
        out_shape=jax.ShapeDtypeStruct((N, C, HW), x.dtype),
        grid_spec=pltpu.PrefetchScalarGridSpec(
            num_scalar_prefetch=0,
            grid=(N // nb,),
            in_specs=[
                pl.BlockSpec((nb, C, HW), lambda n: (n, 0, 0)),       # x
                pl.BlockSpec((C, w_se), lambda n: (0, 0)),            # W1
                pl.BlockSpec((1, w_se), lambda n: (0, 0)),            # b1
                pl.BlockSpec((w_se, C), lambda n: (0, 0)),            # W2
                pl.BlockSpec((1, C), lambda n: (0, 0)),               # b2
            ],
            out_specs=pl.BlockSpec((nb, C, HW), lambda n: (n, 0, 0)),
        ),
        compiler_params=pltpu.CompilerParams(
            dimension_semantics=("parallel",),
            vmem_limit_bytes=vmem_limit),
        # TODO(synk): expose input_output_aliases={0: 0} when callers can
        # donate x (halves peak HBM footprint; identical traffic).
    )(x, w1, b1r, w2, b2r)


# --------------------------------------------------------------------------
# Two-pass fallback: (1) per-channel sums; (tiny FCs in plain JAX); (2) scale.
# --------------------------------------------------------------------------
def _se_two_pass(x, w1, b1, w2, b2, *, inv_hw, two_pass_limit, spatial_tile=None):
    N, C, HW = x.shape
    xdtype = x.dtype
    w_se = w1.shape[1]
    itemsize = jnp.dtype(x.dtype).itemsize

    T = spatial_tile if spatial_tile is not None else _pick_spatial_tile(
        C, HW, itemsize, two_pass_limit)
    T = min(T, HW)
    S = pl.cdiv(HW, T)
    needs_mask = (HW % T) != 0

    # ---- pass 1: per-channel spatial sums (no weights in this pipeline) ----
    def sum_kernel(x_ref, sum_ref, acc_ref):
        s_idx = pl.program_id(1)

        @pl.when(s_idx == 0)
        def _init():
            acc_ref[...] = jnp.zeros_like(acc_ref)

        xt = x_ref[0]                                                 # (C, T)
        if needs_mask:
            lane = jax.lax.broadcasted_iota(jnp.int32, xt.shape, 1)
            xt = jnp.where(s_idx * T + lane < HW, xt, jnp.zeros_like(xt))
        acc_ref[...] += jnp.sum(xt, axis=-1, keepdims=True, dtype=jnp.float32)

        @pl.when(s_idx == pl.num_programs(1) - 1)
        def _finalize():
            sum_ref[0] = acc_ref[...]

    sums = pl.pallas_call(
        sum_kernel,
        out_shape=jax.ShapeDtypeStruct((N, C, 1), jnp.float32),
        grid_spec=pltpu.PrefetchScalarGridSpec(
            num_scalar_prefetch=0,
            grid=(N, S),
            in_specs=[pl.BlockSpec((1, C, T), lambda n, s: (n, 0, s))],
            out_specs=pl.BlockSpec((1, C, 1), lambda n, s: (n, 0, 0)),
            scratch_shapes=[pltpu.VMEM((C, 1), jnp.float32)],
        ),
        compiler_params=pltpu.CompilerParams(
            dimension_semantics=("parallel", "arbitrary"),
            vmem_limit_bytes=two_pass_limit),
    )(x)

    # ---- excitation: one well-shaped batched matmul pair in plain JAX ----
    means = sums[:, :, 0] * inv_hw                                    # (N, C) f32
    z1 = jnp.dot(means, w1.astype(jnp.float32),
                 preferred_element_type=jnp.float32) + b1.astype(jnp.float32)
    z1 = jnp.maximum(z1, 0.0)
    z2 = jnp.dot(z1, w2.astype(jnp.float32),
                 preferred_element_type=jnp.float32) + b2.astype(jnp.float32)
    gate = jax.nn.sigmoid(z2).astype(xdtype).reshape(N, C, 1)

    # ---- pass 2: scale x by the gate (fully parallel (N, S) grid) ----
    def scale_kernel(gate_ref, x_ref, o_ref):
        o_ref[0] = x_ref[0] * gate_ref[0]

    out = pl.pallas_call(
        scale_kernel,
        out_shape=jax.ShapeDtypeStruct((N, C, HW), x.dtype),
        grid_spec=pltpu.PrefetchScalarGridSpec(
            num_scalar_prefetch=0,
            grid=(N, S),
            in_specs=[
                pl.BlockSpec((1, C, 1), lambda n, s: (n, 0, 0)),      # gate
                pl.BlockSpec((1, C, T), lambda n, s: (n, 0, s)),      # x
            ],
            out_specs=pl.BlockSpec((1, C, T), lambda n, s: (n, 0, s)),
        ),
        compiler_params=pltpu.CompilerParams(
            dimension_semantics=("parallel", "parallel"),
            vmem_limit_bytes=two_pass_limit),
    )(gate, x)
    return out


# --------------------------------------------------------------------------
# Public wrapper (PyTorch-compatible NCHW interface).
# --------------------------------------------------------------------------
def se_block(x_nchw, w1, b1, w2, b2, *, force_two_pass=False, spatial_tile=None):
    """SE block. x_nchw: (N, C, H, W); w1: (C, w_se); b1: (w_se,);
    w2: (w_se, C); b2: (C,). Returns (N, C, H, W)."""
    N, C, H, W = x_nchw.shape
    HW = H * W
    w_se = w1.shape[1]
    itemsize = jnp.dtype(x_nchw.dtype).itemsize
    budgets = _budgets()

    # NCHW-native layout: (N, C, H*W) is a pure (free) reshape -- no transposes.
    x = x_nchw.reshape(N, C, HW)
    b1r = b1.reshape(1, w_se).astype(jnp.float32)
    b2r = b2.reshape(1, C).astype(jnp.float32)
    inv_hw = 1.0 / float(HW)

    # Pack multiple images per fused grid step when per-image tiles are tiny
    # (amortizes ~0.35us/step overhead, larger DMAs, batched excitation FCs).
    per_image_bytes = C * HW * itemsize
    pack_target = 2 << 20
    nb = 1
    if per_image_bytes < pack_target:
        cap = int(max(1, min(N, pack_target // max(1, per_image_bytes))))
        for d in range(cap, 0, -1):
            if N % d == 0:          # largest divisor of N -> no partial blocks
                nb = d
                break

    # Fused VMEM estimate: double-buffered in+out x blocks, double-buffered
    # weight/bias blocks, plus ~1 block of f32 temporary headroom.
    blk_bytes = nb * per_image_bytes
    weight_bytes = 2 * 4 * (C * w_se + w_se + w_se * C + C)
    fused_est = 4 * blk_bytes + nb * C * HW * 4 + weight_bytes

    use_fused = (not force_two_pass) and fused_est <= budgets["fused_budget"]
    # On 2-TensorCore parts (v7x), batch-1 large feature maps are better served
    # by the two-pass path: its (N, S) parallel grid shards across both cores.
    if (use_fused and budgets["two_cores"] and (N // nb) < 2
            and per_image_bytes >= (8 << 20)):
        use_fused = False

    if use_fused:
        out = _se_fused(x, w1, b1r, w2, b2r, inv_hw=inv_hw, nb=nb,
                        vmem_limit=budgets["fused_limit"])
    else:
        out = _se_two_pass(x, w1, b1, w2, b2, inv_hw=inv_hw,
                           two_pass_limit=budgets["two_pass_limit"],
                           spatial_tile=spatial_tile)
    return out.reshape(N, C, H, W)


def se_reference(x_nchw, w1, b1, w2, b2):
    """Pure-JAX reference matching the PyTorch SE forward."""
    s = jnp.mean(x_nchw.astype(jnp.float32), axis=(2, 3))    # (N, C)
    z1 = jnp.maximum(s @ w1 + b1, 0.0)                       # (N, w_se)
    z2 = jax.nn.sigmoid(z1 @ w2 + b2)                        # (N, C)
    return x_nchw * z2[:, :, None, None].astype(x_nchw.dtype)


if __name__ == "__main__":
    def make_inputs(key, N, C, H, W, w_se, dtype=jnp.float32):
        kx, k1, kb1, k2, kb2 = jax.random.split(key, 5)
        x = jax.random.normal(kx, (N, C, H, W), dtype=dtype)
        w1 = (jax.random.normal(k1, (C, w_se), dtype=jnp.float32) * 0.5).astype(dtype)
        b1 = (jax.random.normal(kb1, (w_se,), dtype=jnp.float32) * 0.1).astype(dtype)
        w2 = (jax.random.normal(k2, (w_se, C), dtype=jnp.float32) * 0.5).astype(dtype)
        b2 = (jax.random.normal(kb2, (C,), dtype=jnp.float32) * 0.1).astype(dtype)
        return x, w1, b1, w2, b2

    # Case 1: module-consistent small shape -> fused path (with image packing).
    x, w1, b1, w2, b2 = make_inputs(jax.random.PRNGKey(0), 2, 4, 16, 16, 2)
    out = jax.block_until_ready(jax.jit(se_block)(x, w1, b1, w2, b2))
    ref = se_reference(x, w1, b1, w2, b2)
    assert out.shape == x.shape
    assert jnp.allclose(out, ref, atol=1e-5, rtol=1e-5), "fused path mismatch"

    # Case 2: same inputs through the spatially-tiled two-pass fallback
    # (multi-step squeeze accumulation + batched JAX excitation + scale grid).
    two_pass = jax.jit(functools.partial(se_block, force_two_pass=True,
                                         spatial_tile=128))
    out2 = jax.block_until_ready(two_pass(x, w1, b1, w2, b2))
    assert jnp.allclose(out2, ref, atol=1e-5, rtol=1e-5), "two-pass mismatch"

    # Case 3: odd spatial size -> exercises the partial-tile lane mask in the
    # squeeze pass and clipped stores in the scale pass.
    x3, w13, b13, w23, b23 = make_inputs(jax.random.PRNGKey(1), 1, 8, 15, 15, 4)
    out3 = jax.block_until_ready(two_pass(x3, w13, b13, w23, b23))
    ref3 = se_reference(x3, w13, b13, w23, b23)
    assert jnp.allclose(out3, ref3, atol=1e-5, rtol=1e-5), "masked two-pass mismatch"

    # Case 4: bf16 inputs, fused path with multi-image packing (Nb > 1) and a
    # batched excitation matmul; loose tolerance for bf16 rounding.
    x4, w14, b14, w24, b24 = make_inputs(jax.random.PRNGKey(2), 4, 32, 8, 8, 8,
                                         dtype=jnp.bfloat16)
    out4 = jax.block_until_ready(jax.jit(se_block)(x4, w14, b14, w24, b24))
    ref4 = se_reference(x4, w14, b14, w24, b24)
    assert jnp.allclose(out4.astype(jnp.float32), ref4.astype(jnp.float32),
                        atol=0.1, rtol=0.05), "bf16 fused mismatch"

    print("KERNEL_OK")
</pallas_src>

<mosaic_0001>
module attributes {stable_mosaic.version = 11 : i64} {
  func.func @kernel(%arg0: i32, %arg1: memref<2x4x256xf32, #tpu.memory_space<vmem>>, %arg2: memref<4x2xf32, #tpu.memory_space<vmem>>, %arg3: memref<1x2xf32, #tpu.memory_space<vmem>>, %arg4: memref<2x4xf32, #tpu.memory_space<vmem>>, %arg5: memref<1x4xf32, #tpu.memory_space<vmem>>, %arg6: memref<2x4x256xf32, #tpu.memory_space<vmem>>) attributes {dimension_semantics = [#tpu.dimension_semantics<parallel>], iteration_bounds = array<i64: 1>, scalar_prefetch = 0 : i64, scratch_operands = 0 : i64, tpu.core_type = #tpu.core_type<tc>, window_params = [{transform_indices = @transform_0, window_bounds = array<i64: 2, 4, 256>}, {pipeline_mode = #tpu.pipeline_mode<synchronous>, transform_indices = @transform_1, window_bounds = array<i64: 4, 2>}, {pipeline_mode = #tpu.pipeline_mode<synchronous>, transform_indices = @transform_2, window_bounds = array<i64: 1, 2>}, {pipeline_mode = #tpu.pipeline_mode<synchronous>, transform_indices = @transform_3, window_bounds = array<i64: 2, 4>}, {pipeline_mode = #tpu.pipeline_mode<synchronous>, transform_indices = @transform_4, window_bounds = array<i64: 1, 4>}, {transform_indices = @transform_5, window_bounds = array<i64: 2, 4, 256>}]} {
    %c0 = arith.constant 0 : index
    %c0_0 = arith.constant 0 : index
    %c0_1 = arith.constant 0 : index
    %0 = vector.load %arg1[%c0, %c0_0, %c0_1] : memref<2x4x256xf32, #tpu.memory_space<vmem>>, vector<2x4x256xf32>
    %cst = arith.constant dense<0.000000e+00> : vector<2x4xf32>
    %1 = vector.multi_reduction <add>, %0, %cst [2] : vector<2x4x256xf32> to vector<2x4xf32>
    %cst_2 = arith.constant 3.906250e-03 : f32
    %2 = vector.broadcast %cst_2 : f32 to vector<2x4xf32>
    %3 = arith.mulf %1, %2 : vector<2x4xf32>
    %c0_3 = arith.constant 0 : index
    %c0_4 = arith.constant 0 : index
    %4 = vector.load %arg2[%c0_3, %c0_4] : memref<4x2xf32, #tpu.memory_space<vmem>>, vector<4x2xf32>
    %cst_5 = arith.constant dense<0.000000e+00> : vector<2x2xf32>
    %5 = tpu.matmul %3, %4, %cst_5 {dimension_numbers = #tpu.dot_dimension_numbers<[1], [0], [0], [1], [0, 0, 1, 1], [], []>} : vector<2x4xf32>, vector<4x2xf32>, vector<2x2xf32> -> vector<2x2xf32>
    %c0_6 = arith.constant 0 : index
    %c0_7 = arith.constant 0 : index
    %6 = vector.load %arg3[%c0_6, %c0_7] : memref<1x2xf32, #tpu.memory_space<vmem>>, vector<1x2xf32>
    %7 = vector.broadcast %6 : vector<1x2xf32> to vector<2x2xf32>
    %8 = arith.addf %5, %7 : vector<2x2xf32>
    %cst_8 = arith.constant 0.000000e+00 : f32
    %9 = vector.broadcast %cst_8 : f32 to vector<2x2xf32>
    %10 = arith.maximumf %8, %9 : vector<2x2xf32>
    %c0_9 = arith.constant 0 : index
    %c0_10 = arith.constant 0 : index
    %11 = vector.load %arg4[%c0_9, %c0_10] : memref<2x4xf32, #tpu.memory_space<vmem>>, vector<2x4xf32>
    %cst_11 = arith.constant dense<0.000000e+00> : vector<2x4xf32>
    %12 = tpu.matmul %10, %11, %cst_11 {dimension_numbers = #tpu.dot_dimension_numbers<[1], [0], [0], [1], [0, 0, 1, 1], [], []>} : vector<2x2xf32>, vector<2x4xf32>, vector<2x4xf32> -> vector<2x4xf32>
    %c0_12 = arith.constant 0 : index
    %c0_13 = arith.constant 0 : index
    %13 = vector.load %arg5[%c0_12, %c0_13] : memref<1x4xf32, #tpu.memory_space<vmem>>, vector<1x4xf32>
    %14 = vector.broadcast %13 : vector<1x4xf32> to vector<2x4xf32>
    %15 = arith.addf %12, %14 : vector<2x4xf32>
    %16 = arith.negf %15 : vector<2x4xf32>
    %17 = math.exp %16 : vector<2x4xf32>
    %cst_14 = arith.constant 1.000000e+00 : f32
    %18 = vector.broadcast %cst_14 : f32 to vector<2x4xf32>
    %19 = arith.addf %18, %17 : vector<2x4xf32>
    %20 = arith.divf %18, %19 : vector<2x4xf32>
    %21 = vector.shape_cast %20 : vector<2x4xf32> to vector<2x4x1xf32>
    %22 = vector.broadcast %21 : vector<2x4x1xf32> to vector<2x4x256xf32>
    %23 = arith.mulf %0, %22 : vector<2x4x256xf32>
    %c0_15 = arith.constant 0 : index
    %c0_16 = arith.constant 0 : index
    %c0_17 = arith.constant 0 : index
    %24 = vector.load %arg6[%c0_15, %c0_16, %c0_17] : memref<2x4x256xf32, #tpu.memory_space<vmem>>, vector<2x4x256xf32>
    tpu.vector_store %arg6[%c0_15, %c0_16, %c0_17], %23 {strides = array<i32>} : memref<2x4x256xf32, #tpu.memory_space<vmem>>, vector<2x4x256xf32>,
    return
  }
  func.func @transform_0(%arg0: i32) -> (i32, i32, i32) {
    %c0_i32 = arith.constant 0 : i32
    %c0_i32_0 = arith.constant 0 : i32
    %c0_i32_1 = arith.constant 0 : i32
    return %arg0, %c0_i32, %c0_i32_0 : i32, i32, i32
  }
  func.func @transform_1(%arg0: i32) -> (i32, i32) {
    %c0_i32 = arith.constant 0 : i32
    %c0_i32_0 = arith.constant 0 : i32
    %c0_i32_1 = arith.constant 0 : i32
    return %c0_i32, %c0_i32_0 : i32, i32
  }
  func.func @transform_2(%arg0: i32) -> (i32, i32) {
    %c0_i32 = arith.constant 0 : i32
    %c0_i32_0 = arith.constant 0 : i32
    %c0_i32_1 = arith.constant 0 : i32
    return %c0_i32, %c0_i32_0 : i32, i32
  }
  func.func @transform_3(%arg0: i32) -> (i32, i32) {
    %c0_i32 = arith.constant 0 : i32
    %c0_i32_0 = arith.constant 0 : i32
    %c0_i32_1 = arith.constant 0 : i32
    return %c0_i32, %c0_i32_0 : i32, i32
  }
  func.func @transform_4(%arg0: i32) -> (i32, i32) {
    %c0_i32 = arith.constant 0 : i32
    %c0_i32_0 = arith.constant 0 : i32
    %c0_i32_1 = arith.constant 0 : i32
    return %c0_i32, %c0_i32_0 : i32, i32
  }
  func.func @transform_5(%arg0: i32) -> (i32, i32, i32) {
    %c0_i32 = arith.constant 0 : i32
    %c0_i32_0 = arith.constant 0 : i32
    %c0_i32_1 = arith.constant 0 : i32
    return %arg0, %c0_i32, %c0_i32_0 : i32, i32, i32
  }
}

</mosaic_0001>

<llo_original>
// kernel: se_block.1
$region0: #{se_block.1}
  #allocation0 [shape = 'u32[]', space=smem, size = 0x4, offset = 0x4, fixed_abs, tag = 'smem constant byte address 0x4 - core index']
  #allocation1 [shape = 'u32[144,128]{1,0:T(1,128)}', space=vmem, size = 0x12000, scoped, tag = 'internal scratch']
  %s0 = inlined_call_operand.vmem [shape: f32[2,4,256], index: 0, kind: input, shape index: {}]
  %s1 = inlined_call_operand.vmem [shape: f32[4,2], index: 1, kind: input, shape index: {}]
  %s2 = inlined_call_operand.vmem [shape: f32[1,2], index: 2, kind: input, shape index: {}]
  %s3 = inlined_call_operand.vmem [shape: f32[2,4], index: 3, kind: input, shape index: {}]
  %s4 = inlined_call_operand.vmem [shape: f32[1,4], index: 4, kind: input, shape index: {}]
  %s5 = inlined_call_operand.vmem [shape: f32[2,4,256], index: 5, kind: output, shape index: {}]
  %s6 = sld [smem:[#allocation0]]
  $region30: #{se_block.1} parent=0
    _
  %s8 = ssub.s32 1, %s6
  %s9 = scalar_select 0, %s8, %s6
  // Predicated region
  $region2: #{se_block.1} parent=0 // pred_check
    _
  $region3: #{se_block.1} parent=0 // pred_check_branch
    %11 = sbr.rel (0) target = $region5
  $region4: #{se_block.1} parent=0 // pred_region
    _
  $region5: #{se_block.1} parent=0 // pred_fallthru
    _
  // Predicated region
  $region6: #{se_block.1} parent=0 // pred_check
    _
  $region7: #{se_block.1} parent=0 // pred_check_branch
    %13 = sbr.rel (0) target = $region9
  $region8: #{se_block.1} parent=0 // pred_region
    _
  $region9: #{se_block.1} parent=0 // pred_fallthru
    _
  // Predicated region
  $region10: #{se_block.1} parent=0 // pred_check
    _
  $region11: #{se_block.1} parent=0 // pred_check_branch
    %15 = sbr.rel (0) target = $region13
  $region12: #{se_block.1} parent=0 // pred_region
    _
  $region13: #{se_block.1} parent=0 // pred_fallthru
    _
  // Predicated region
  $region14: #{se_block.1} parent=0 // pred_check
    _
  $region15: #{se_block.1} parent=0 // pred_check_branch
    %17 = sbr.rel (0) target = $region17
  $region16: #{se_block.1} parent=0 // pred_region
    _
  $region17: #{se_block.1} parent=0 // pred_fallthru
    _
  // Predicated region
  $region18: #{se_block.1} parent=0 // pred_check
    _
  $region19: #{se_block.1} parent=0 // pred_check_branch
    %19 = sbr.rel (0) target = $region21
  $region20: #{se_block.1} parent=0 // pred_region
    _
  $region21: #{se_block.1} parent=0 // pred_fallthru
    _
  %v20 = vld [vmem:[%s0] sm:$0xff]
  %v21 = vld [vmem:[%s0 + $0x8] sm:$0xff]
  %v24 = vcombine.high %v20, %v20
  %v25 = vcombine.high %v21, %v21
  %vm28 = vcmask 1043456
  %v29 = vsel %vm28, %v20, 0.0
  %v30 = vsel %vm28, %v24, 0.0
  %v31 = vadd.f32 %v29, %v30
  %32 = vadd.xlane.f32.xlu0 %v31
  %v33 = vpop.xlane.xlu0 %32
  %v34 = vsel %vm28, %v21, 0.0
  %v35 = vsel %vm28, %v25, 0.0
  %v36 = vadd.f32 %v34, %v35
  %37 = vadd.xlane.f32.xlu0 %v36
  %v38 = vpop.xlane.xlu0 %37
  %v39 = vmul.f32 %v33, 0.00390625
  %v40 = vmul.f32 %v38, 0.00390625
  %v41 = vld [vmem:[%s1] sm:$0xf]
  %v42 = vld [vmem:[%s2] sm:$0x1]
  %v44 = vlaneseq
  %v45 = vshrl.u32 %v44, 7
  %v46 = vsub.s32 0, %v45
  %v47 = vrot.slane %v42, %v46
  %v51 = vlaneseq
  %v52 = vand.u32 %v51, 127
  %v53 = vlaneseq
  %v54 = vshrl.u32 %v53, 7
  %v55 = vsub.s32 %v52, %v54
  %v56 = vrot.slane %v39, %v55
  %v57 = vlaneseq
  %v58 = vshrl.u32 %v57, 7
  %v59 = vsub.s32 %v52, %v58
  %v60 = vrot.slane %v40, %v59
  %vm61 = vcmask 1041409
  %v62 = vsel %vm61, %v60, %v56
  %vm63 = vcmask 31744
  %v64 = vsel %vm63, %v62, 0
  %v67 = vsel %vm28, %v41, 0
  %69 = vmatprep.subr.mxu0 0.0
  %70 = vmatpush1.msra.mxu0 0.0
  %71 = vmatprep.subr.mxu0 0.0
  %72 = vmatpush1.msra.mxu0 0.0
  %73 = vmatprep.subr.mxu0 0.0
  %74 = vmatpush1.msra.mxu0 0.0
  %75 = vmatprep.subr.mxu0 0.0
  %76 = vmatpush1.msra.mxu0 0.0
  %77 = vmatprep.subr.mxu0 0.0
  %78 = vmatpush1.msra.mxu0 0.0
  %79 = vmatprep.subr.mxu0 0.0
  %80 = vmatpush1.msra.mxu0 0.0
  %81 = vmatprep.subr.mxu0 0.0
  %82 = vmatpush1.msra.mxu0 0.0
  %83 = vmatprep.subr.mxu0 0.0
  %84 = vmatpush1.msra.mxu0 0.0
  %85 = vmatprep.subr.mxu0 0.0
  %86 = vmatpush1.msra.mxu0 0.0
  %87 = vmatprep.subr.mxu0 0.0
  %88 = vmatpush1.msra.mxu0 0.0
  %89 = vmatprep.subr.mxu0 0.0
  %90 = vmatpush1.msra.mxu0 0.0
  %91 = vmatprep.subr.mxu0 0.0
  %92 = vmatpush1.msra.mxu0 0.0
  %93 = vmatprep.subr.mxu0 0.0
  %94 = vmatpush1.msra.mxu0 0.0
  %95 = vmatprep.subr.mxu0 0.0
  %96 = vmatpush1.msra.mxu0 0.0
  %97 = vmatprep.subr.mxu0 0.0
  %98 = vmatpush1.msra.mxu0 0.0
  %99 = vmatprep.subr.mxu0 0.0
  %100 = vmatpush1.msra.mxu0 %v67
  %101 = vmatprep.subr.mxu0 0.0
  %102 = vmatpush2.msra.mxu0 0.0
  %103 = vmatprep.subr.mxu0 0.0
  %104 = vmatpush2.msra.mxu0 0.0
  %105 = vmatprep.subr.mxu0 0.0
  %106 = vmatpush2.msra.mxu0 0.0
  %107 = vmatprep.subr.mxu0 0.0
  %108 = vmatpush2.msra.mxu0 0.0
  %109 = vmatprep.subr.mxu0 0.0
  %110 = vmatpush2.msra.mxu0 0.0
  %111 = vmatprep.subr.mxu0 0.0
  %112 = vmatpush2.msra.mxu0 0.0
  %113 = vmatprep.subr.mxu0 0.0
  %114 = vmatpush2.msra.mxu0 0.0
  %115 = vmatprep.subr.mxu0 0.0
  %116 = vmatpush2.msra.mxu0 0.0
  %117 = vmatprep.subr.mxu0 0.0
  %118 = vmatpush2.msra.mxu0 0.0
  %119 = vmatprep.subr.mxu0 0.0
  %120 = vmatpush2.msra.mxu0 0.0
  %121 = vmatprep.subr.mxu0 0.0
  %122 = vmatpush2.msra.mxu0 0.0
  %123 = vmatprep.subr.mxu0 0.0
  %124 = vmatpush2.msra.mxu0 0.0
  %125 = vmatprep.subr.mxu0 0.0
  %126 = vmatpush2.msra.mxu0 0.0
  %127 = vmatprep.subr.mxu0 0.0
  %128 = vmatpush2.msra.mxu0 0.0
  %129 = vmatprep.subr.mxu0 0.0
  %130 = vmatpush2.msra.mxu0 0.0
  %131 = vmatprep.subr.mxu0 0.0
  %132 = vmatpush2.msra.mxu0 0.0
  %133 = vmatprep.mubr.f32.mxu0 0.0
  %134 = vmatmul.mubr.f32.gmra.mxu0 %v64
  %v135 = vpop.f32.mrf.mxu0
  %v136 = vadd.f32 %v47, %v135
  %v137 = vpop.f32.mrf.mxu0
  %138 = vdwg.mxu0
  %v139 = vmax.f32 %v136, 0.0
  %v140 = vld [vmem:[%s3] sm:$0x3]
  %v141 = vld [vmem:[%s4] sm:$0x1]
  %v143 = vlaneseq
  %v144 = vshrl.u32 %v143, 7
  %v145 = vsub.s32 0, %v144
  %v146 = vrot.slane %v141, %v145
  %vm148 = vcmask 15360
  %v150 = vsel %vm148, %v139, 0
  %vm152 = vcmask 1041408
  %v154 = vsel %vm152, %v140, 0
  %156 = vmatprep.subr.mxu0 0.0
  %157 = vmatpush1.msra.mxu0 0.0
  %158 = vmatprep.subr.mxu0 0.0
  %159 = vmatpush1.msra.mxu0 0.0
  %160 = vmatprep.subr.mxu0 0.0
  %161 = vmatpush1.msra.mxu0 0.0
  %162 = vmatprep.subr.mxu0 0.0
  %163 = vmatpush1.msra.mxu0 0.0
  %164 = vmatprep.subr.mxu0 0.0
  %165 = vmatpush1.msra.mxu0 0.0
  %166 = vmatprep.subr.mxu0 0.0
  %167 = vmatpush1.msra.mxu0 0.0
  %168 = vmatprep.subr.mxu0 0.0
  %169 = vmatpush1.msra.mxu0 0.0
  %170 = vmatprep.subr.mxu0 0.0
  %171 = vmatpush1.msra.mxu0 0.0
  %172 = vmatprep.subr.mxu0 0.0
  %173 = vmatpush1.msra.mxu0 0.0
  %174 = vmatprep.subr.mxu0 0.0
  %175 = vmatpush1.msra.mxu0 0.0
  %176 = vmatprep.subr.mxu0 0.0
  %177 = vmatpush1.msra.mxu0 0.0
  %178 = vmatprep.subr.mxu0 0.0
  %179 = vmatpush1.msra.mxu0 0.0
  %180 = vmatprep.subr.mxu0 0.0
  %181 = vmatpush1.msra.mxu0 0.0
  %182 = vmatprep.subr.mxu0 0.0
  %183 = vmatpush1.msra.mxu0 0.0
  %184 = vmatprep.subr.mxu0 0.0
  %185 = vmatpush1.msra.mxu0 0.0
  %186 = vmatprep.subr.mxu0 0.0
  %187 = vmatpush1.msra.mxu0 %v154
  %188 = vmatprep.subr.mxu0 0.0
  %189 = vmatpush2.msra.mxu0 0.0
  %190 = vmatprep.subr.mxu0 0.0
  %191 = vmatpush2.msra.mxu0 0.0
  %192 = vmatprep.subr.mxu0 0.0
  %193 = vmatpush2.msra.mxu0 0.0
  %194 = vmatprep.subr.mxu0 0.0
  %195 = vmatpush2.msra.mxu0 0.0
  %196 = vmatprep.subr.mxu0 0.0
  %197 = vmatpush2.msra.mxu0 0.0
  %198 = vmatprep.subr.mxu0 0.0
  %199 = vmatpush2.msra.mxu0 0.0
  %200 = vmatprep.subr.mxu0 0.0
  %201 = vmatpush2.msra.mxu0 0.0
  %202 = vmatprep.subr.mxu0 0.0
  %203 = vmatpush2.msra.mxu0 0.0
  %204 = vmatprep.subr.mxu0 0.0
  %205 = vmatpush2.msra.mxu0 0.0
  %206 = vmatprep.subr.mxu0 0.0
  %207 = vmatpush2.msra.mxu0 0.0
  %208 = vmatprep.subr.mxu0 0.0
  %209 = vmatpush2.msra.mxu0 0.0
  %210 = vmatprep.subr.mxu0 0.0
  %211 = vmatpush2.msra.mxu0 0.0
  %212 = vmatprep.subr.mxu0 0.0
  %213 = vmatpush2.msra.mxu0 0.0
  %214 = vmatprep.subr.mxu0 0.0
  %215 = vmatpush2.msra.mxu0 0.0
  %216 = vmatprep.subr.mxu0 0.0
  %217 = vmatpush2.msra.mxu0 0.0
  %218 = vmatprep.subr.mxu0 0.0
  %219 = vmatpush2.msra.mxu0 0.0
  %220 = vmatprep.mubr.f32.mxu0 0.0
  %221 = vmatmul.mubr.f32.gmra.mxu0 %v150
  %v222 = vpop.f32.mrf.mxu0
  %v223 = vadd.f32 %v146, %v222
  %v224 = vpop.f32.mrf.mxu0
  %225 = vdwg.mxu0
  %v226 = vxor.u32 %v223, 2147483648
  %v227 = vmul.f32 %v226, 1.442695
  %v228 = vpow.pop %v227
  %v229 = vadd.f32 %v228, 1.0
  %v230 = vrcp.pop %v229
  %v231 = vmul.f32 1.0, %v230
  %v232 = vlaneseq
  %v233 = vshrl.u32 %v232, 7
  %v234 = vsub.s32 0, %v233
  %v235 = vrot.slane %v231, %v234
  %237 = vbcast.lane.b32.xlu0 %v235, 256
  %v238 = vpop.permute.xlu0 %237
  %v239 = vlaneseq
  %v240 = vshrl.u32 %v239, 7
  %v241 = vsub.s32 1, %v240
  %v242 = vrot.slane %v231, %v241
  %244 = vbcast.lane.b32.xlu0 %v242, 256
  %v245 = vpop.permute.xlu0 %244
  %v249 = vunpack.c.l.s4 839922192
  %v250 = vunpack.c.0.s8 %v249
  %v251 = vlaneseq
  %v252 = vshrl.u32 %v251, 7
  %v253 = vsub.s32 %v250, %v252
  %v254 = vrot.slane %v238, %v253
  %v256 = vunpack.c.l.s4 839922192
  %v257 = vunpack.c.0.s8 %v256
  %v258 = vlaneseq
  %v259 = vshrl.u32 %v258, 7
  %v260 = vsub.s32 %v257, %v259
  %v261 = vrot.slane %v245, %v260
  %v264 = vmul.f32 %v20, %v254
  %v265 = vmul.f32 %v21, %v261
  %266 = vst [vmem:[%s5] sm:$0xff] %v264
  %267 = vst [vmem:[%s5 + $0x8] sm:$0xff] %v265
  // Predicated region
  $region22: #{se_block.1} parent=0 // pred_check
    _
  $region23: #{se_block.1} parent=0 // pred_check_branch
    %269 = sbr.rel (0) target = $region25
  $region24: #{se_block.1} parent=0 // pred_region
    _
  $region25: #{se_block.1} parent=0 // pred_fallthru
    _
  // Predicated region
  $region26: #{se_block.1} parent=0 // pred_check
    _
  $region27: #{se_block.1} parent=0 // pred_check_branch
    %271 = sbr.rel (0) target = $region29
  $region28: #{se_block.1} parent=0 // pred_region
    _
  $region29: #{se_block.1} parent=0 // pred_fallthru
    _

</llo_original>
